<compile_context>
chip_gen: v5e
topology: v5e:2x2
jax: 0.10.0
libtpu: 0.0.40
codegen_flags: <defaults>
</compile_context>

<pallas_src>
import jax
import jax.numpy as jnp
from jax.experimental import pallas as pl
from jax.experimental.pallas import tpu as pltpu

_LANE = 128            # lane-dense last dim
_SUBLANE = 8           # f32 sublane count (one vreg = 8 x 128)
_MAX_TILE_ROWS = 1024  # (1024, 128) f32 = 512 KiB per input per grid step


def _bce_sums_kernel(real_ref, fake_ref, out_ref, racc_ref, facc_ref):
    """Per grid step: one (TR, 128) tile from each input.
       racc/facc: (8, 128) f32 VMEM accumulators (resident across the grid).
       On the last step:
         out[0] = sum over all real elements of min(-log(real), 100)
         out[1] = sum over all fake elements of min(-log(1 - fake), 100)."""
    step = pl.program_id(0)

    @pl.when(step == 0)
    def _():
        racc_ref[...] = jnp.zeros_like(racc_ref)
        facc_ref[...] = jnp.zeros_like(facc_ref)

    r = real_ref[...].astype(jnp.float32)   # (TR, 128)
    f = fake_ref[...].astype(jnp.float32)   # (TR, 128)

    # BCE against target=1: -log(r);  BCE against target=0: -log(1 - f).
    # PyTorch clamps log at -100  =>  per-element loss capped at 100
    # (also turns -log(0)=inf into 100, matching torch).
    real_nll = jnp.minimum(-jnp.log(r), 100.0)
    fake_nll = jnp.minimum(-jnp.log(1.0 - f), 100.0)

    tr = real_nll.shape[0]
    # Fold the tile's vregs onto one (8,128) vreg: row groups of 8 are exactly
    # native (8,128) tiles, so this reshape is layout-free and the axis-0 sum
    # lowers to plain VPU adds (no XLU work on the hot path).
    racc_ref[...] += real_nll.reshape(tr // _SUBLANE, _SUBLANE, _LANE).sum(axis=0)
    facc_ref[...] += fake_nll.reshape(tr // _SUBLANE, _SUBLANE, _LANE).sum(axis=0)

    @pl.when(step == pl.num_programs(0) - 1)
    def _():
        out_ref[0] = jnp.sum(racc_ref[...])
        out_ref[1] = jnp.sum(facc_ref[...])


def _round_up(x, m):
    return ((x + m - 1) // m) * m


@jax.jit
def discriminator_loss(real_output, fake_output):
    """real_output, fake_output: arrays of probabilities in [0, 1], any shape.
    Returns scalar BCE(real, ones) + BCE(fake, zeros)."""
    n_r = int(real_output.size)
    n_f = int(fake_output.size)
    assert n_r > 0 and n_f > 0

    # Lane-dense layout: flatten -> pad -> (rows, 128). Both inputs share the
    # same padded row count so a single grid covers both.
    rows_needed = max(_round_up(max(n_r, n_f), _LANE) // _LANE, _SUBLANE)
    tile_rows = min(_MAX_TILE_ROWS, _round_up(rows_needed, _SUBLANE))
    total_rows = _round_up(rows_needed, tile_rows)
    grid = total_rows // tile_rows

    # Neutral padding: real pads with 1 (-log(1)=0), fake pads with 0
    # (-log(1-0)=0), so padded elements contribute exactly zero to the sums.
    r_flat = jnp.pad(real_output.reshape(-1).astype(jnp.float32),
                     (0, total_rows * _LANE - n_r), constant_values=1.0)
    f_flat = jnp.pad(fake_output.reshape(-1).astype(jnp.float32),
                     (0, total_rows * _LANE - n_f), constant_values=0.0)
    r2d = r_flat.reshape(total_rows, _LANE)
    f2d = f_flat.reshape(total_rows, _LANE)

    sums = pl.pallas_call(
        _bce_sums_kernel,
        out_shape=jax.ShapeDtypeStruct((2,), jnp.float32),
        grid_spec=pltpu.PrefetchScalarGridSpec(
            num_scalar_prefetch=0,
            grid=(grid,),
            in_specs=[
                pl.BlockSpec((tile_rows, _LANE), lambda i: (i, 0)),  # real
                pl.BlockSpec((tile_rows, _LANE), lambda i: (i, 0)),  # fake
            ],
            out_specs=pl.BlockSpec(memory_space=pltpu.MemorySpace.SMEM),
            scratch_shapes=[
                pltpu.VMEM((_SUBLANE, _LANE), jnp.float32),  # real accumulator
                pltpu.VMEM((_SUBLANE, _LANE), jnp.float32),  # fake accumulator
            ],
        ),
        compiler_params=pltpu.CompilerParams(
            dimension_semantics=("arbitrary",),   # sequential accumulation
        ),
    )(r2d, f2d)

    real_loss = sums[0] / n_r
    fake_loss = sums[1] / n_f
    return real_loss + fake_loss


if __name__ == "__main__":
    key = jax.random.PRNGKey(0)
    k1, k2 = jax.random.split(key)

    # Typical GAN discriminator outputs: per-patch probabilities in (0, 1).
    B, C, H, W = 2, 1, 16, 16
    real_output = jax.nn.sigmoid(jax.random.normal(k1, (B, C, H, W), dtype=jnp.float32))
    fake_output = jax.nn.sigmoid(jax.random.normal(k2, (B, C, H, W), dtype=jnp.float32))

    loss = discriminator_loss(real_output, fake_output)
    jax.block_until_ready(loss)

    # Correctness check against a pure-JAX reference of the module
    # (same -100 log clamp as torch.nn.BCELoss).
    ref = (jnp.mean(jnp.minimum(-jnp.log(real_output), 100.0))
           + jnp.mean(jnp.minimum(-jnp.log(1.0 - fake_output), 100.0)))
    assert jnp.allclose(loss, ref, rtol=1e-5, atol=1e-6), (loss, ref)

    print("KERNEL_OK")
</pallas_src>

<mosaic_0001>
module attributes {stable_mosaic.version = 11 : i64} {
  func.func @_bce_sums_kernel(%arg0: i32, %arg1: memref<8x128xf32, #tpu.memory_space<vmem>>, %arg2: memref<8x128xf32, #tpu.memory_space<vmem>>, %arg3: memref<2xf32, #tpu.memory_space<smem>>, %arg4: memref<8x128xf32, #tpu.memory_space<vmem>>, %arg5: memref<8x128xf32, #tpu.memory_space<vmem>>) attributes {dimension_semantics = [#tpu.dimension_semantics<arbitrary>], iteration_bounds = array<i64: 1>, scalar_prefetch = 0 : i64, scratch_operands = 2 : i64, tpu.core_type = #tpu.core_type<tc>, window_params = [{transform_indices = @transform_0, window_bounds = array<i64: 8, 128>}, {transform_indices = @transform_1, window_bounds = array<i64: 8, 128>}, {transform_indices = @transform_2, window_bounds = array<i64: 2>}]} {
    %c0_i32 = arith.constant 0 : i32
    %0 = arith.cmpi eq, %arg0, %c0_i32 : i32
    %1 = arith.extui %0 : i1 to i32
    %c0_i32_0 = arith.constant 0 : i32
    %2 = arith.cmpi ne, %1, %c0_i32_0 : i32
    scf.if %2 {
      %cst_20 = arith.constant 0.000000e+00 : f32
      %30 = vector.broadcast %cst_20 : f32 to vector<8x128xf32>
      %c0_21 = arith.constant 0 : index
      %c0_22 = arith.constant 0 : index
      %31 = vector.load %arg4[%c0_21, %c0_22] : memref<8x128xf32, #tpu.memory_space<vmem>>, vector<8x128xf32>
      tpu.vector_store %arg4[%c0_21, %c0_22], %30 {strides = array<i32>} : memref<8x128xf32, #tpu.memory_space<vmem>>, vector<8x128xf32>,
      %cst_23 = arith.constant 0.000000e+00 : f32
      %32 = vector.broadcast %cst_23 : f32 to vector<8x128xf32>
      %c0_24 = arith.constant 0 : index
      %c0_25 = arith.constant 0 : index
      %33 = vector.load %arg5[%c0_24, %c0_25] : memref<8x128xf32, #tpu.memory_space<vmem>>, vector<8x128xf32>
      tpu.vector_store %arg5[%c0_24, %c0_25], %32 {strides = array<i32>} : memref<8x128xf32, #tpu.memory_space<vmem>>, vector<8x128xf32>,
    } else {
    }
    %c0 = arith.constant 0 : index
    %c0_1 = arith.constant 0 : index
    %3 = vector.load %arg1[%c0, %c0_1] : memref<8x128xf32, #tpu.memory_space<vmem>>, vector<8x128xf32>
    %c0_2 = arith.constant 0 : index
    %c0_3 = arith.constant 0 : index
    %4 = vector.load %arg2[%c0_2, %c0_3] : memref<8x128xf32, #tpu.memory_space<vmem>>, vector<8x128xf32>
    %5 = math.log %3 : vector<8x128xf32>
    %cst = arith.constant 0.000000e+00 : f32
    %6 = vector.broadcast %cst : f32 to vector<8x128xf32>
    %7 = arith.subf %6, %5 : vector<8x128xf32>
    %cst_4 = arith.constant 1.000000e+02 : f32
    %8 = vector.broadcast %cst_4 : f32 to vector<8x128xf32>
    %9 = arith.minimumf %7, %8 : vector<8x128xf32>
    %cst_5 = arith.constant 1.000000e+00 : f32
    %10 = vector.broadcast %cst_5 : f32 to vector<8x128xf32>
    %11 = arith.subf %10, %4 : vector<8x128xf32>
    %12 = math.log %11 : vector<8x128xf32>
    %cst_6 = arith.constant 0.000000e+00 : f32
    %13 = vector.broadcast %cst_6 : f32 to vector<8x128xf32>
    %14 = arith.subf %13, %12 : vector<8x128xf32>
    %cst_7 = arith.constant 1.000000e+02 : f32
    %15 = vector.broadcast %cst_7 : f32 to vector<8x128xf32>
    %16 = arith.minimumf %14, %15 : vector<8x128xf32>
    %c0_8 = arith.constant 0 : index
    %c0_9 = arith.constant 0 : index
    %17 = vector.load %arg4[%c0_8, %c0_9] : memref<8x128xf32, #tpu.memory_space<vmem>>, vector<8x128xf32>
    %18 = vector.shape_cast %9 : vector<8x128xf32> to vector<1x8x128xf32>
    %cst_10 = arith.constant dense<0.000000e+00> : vector<8x128xf32>
    %19 = vector.multi_reduction <add>, %18, %cst_10 [0] : vector<1x8x128xf32> to vector<8x128xf32>
    %20 = arith.addf %17, %19 : vector<8x128xf32>
    %c0_11 = arith.constant 0 : index
    %c0_12 = arith.constant 0 : index
    %21 = vector.load %arg4[%c0_11, %c0_12] : memref<8x128xf32, #tpu.memory_space<vmem>>, vector<8x128xf32>
    tpu.vector_store %arg4[%c0_11, %c0_12], %20 {strides = array<i32>} : memref<8x128xf32, #tpu.memory_space<vmem>>, vector<8x128xf32>,
    %c0_13 = arith.constant 0 : index
    %c0_14 = arith.constant 0 : index
    %22 = vector.load %arg5[%c0_13, %c0_14] : memref<8x128xf32, #tpu.memory_space<vmem>>, vector<8x128xf32>
    %23 = vector.shape_cast %16 : vector<8x128xf32> to vector<1x8x128xf32>
    %cst_15 = arith.constant dense<0.000000e+00> : vector<8x128xf32>
    %24 = vector.multi_reduction <add>, %23, %cst_15 [0] : vector<1x8x128xf32> to vector<8x128xf32>
    %25 = arith.addf %22, %24 : vector<8x128xf32>
    %c0_16 = arith.constant 0 : index
    %c0_17 = arith.constant 0 : index
    %26 = vector.load %arg5[%c0_16, %c0_17] : memref<8x128xf32, #tpu.memory_space<vmem>>, vector<8x128xf32>
    tpu.vector_store %arg5[%c0_16, %c0_17], %25 {strides = array<i32>} : memref<8x128xf32, #tpu.memory_space<vmem>>, vector<8x128xf32>,
    %c0_i32_18 = arith.constant 0 : i32
    %27 = arith.cmpi eq, %arg0, %c0_i32_18 : i32
    %28 = arith.extui %27 : i1 to i32
    %c0_i32_19 = arith.constant 0 : i32
    %29 = arith.cmpi ne, %28, %c0_i32_19 : i32
    scf.if %29 {
      %c0_20 = arith.constant 0 : index
      %c0_21 = arith.constant 0 : index
      %30 = vector.load %arg4[%c0_20, %c0_21] : memref<8x128xf32, #tpu.memory_space<vmem>>, vector<8x128xf32>
      %31 = vector.shape_cast %30 : vector<8x128xf32> to vector<1x8x128xf32>
      %cst_22 = arith.constant dense<0.000000e+00> : vector<1xf32>
      %32 = vector.multi_reduction <add>, %31, %cst_22 [1, 2] : vector<1x8x128xf32> to vector<1xf32>
      %33 = vector.shape_cast %32 : vector<1xf32> to vector<1x1x1xf32>
      %34 = vector.extract %33[0, 0, 0] : f32 from vector<1x1x1xf32>
      %c0_23 = arith.constant 0 : index
      %35 = memref.load %arg3[%c0_23] : memref<2xf32, #tpu.memory_space<smem>>
      memref.store %34, %arg3[%c0_23] : memref<2xf32, #tpu.memory_space<smem>>
      %c0_24 = arith.constant 0 : index
      %c0_25 = arith.constant 0 : index
      %36 = vector.load %arg5[%c0_24, %c0_25] : memref<8x128xf32, #tpu.memory_space<vmem>>, vector<8x128xf32>
      %37 = vector.shape_cast %36 : vector<8x128xf32> to vector<1x8x128xf32>
      %cst_26 = arith.constant dense<0.000000e+00> : vector<1xf32>
      %38 = vector.multi_reduction <add>, %37, %cst_26 [1, 2] : vector<1x8x128xf32> to vector<1xf32>
      %39 = vector.shape_cast %38 : vector<1xf32> to vector<1x1x1xf32>
      %40 = vector.extract %39[0, 0, 0] : f32 from vector<1x1x1xf32>
      %c1 = arith.constant 1 : index
      %41 = memref.load %arg3[%c1] : memref<2xf32, #tpu.memory_space<smem>>
      memref.store %40, %arg3[%c1] : memref<2xf32, #tpu.memory_space<smem>>
    } else {
    }
    return
  }
  func.func @transform_0(%arg0: i32) -> (i32, i32) {
    %c0_i32 = arith.constant 0 : i32
    %c0_i32_0 = arith.constant 0 : i32
    return %arg0, %c0_i32 : i32, i32
  }
  func.func @transform_1(%arg0: i32) -> (i32, i32) {
    %c0_i32 = arith.constant 0 : i32
    %c0_i32_0 = arith.constant 0 : i32
    return %arg0, %c0_i32 : i32, i32
  }
  func.func @transform_2(%arg0: i32) -> i32 {
    %c0_i32 = arith.constant 0 : i32
    %c0_i32_0 = arith.constant 0 : i32
    return %c0_i32 : i32
  }
}

</mosaic_0001>

<llo_original>
// kernel: discriminator_loss.1
$region0: #{discriminator_loss.1}
  #allocation0 [shape = 'u32[]', space=smem, size = 0x4, offset = 0x4, fixed_abs, tag = 'smem constant byte address 0x4 - core index']
  #allocation1 [shape = 'u32[72,128]{1,0:T(1,128)}', space=vmem, size = 0x9000, scoped, tag = 'internal scratch']
  #allocation2 [shape = 'f32[8,128]{1,0:T(8,128)}', space=vmem, size = 0x1000, scoped, tag = 'scratch operand']
  #allocation3 [shape = 'f32[8,128]{1,0:T(8,128)}', space=vmem, size = 0x1000, scoped, tag = 'scratch operand']
  %s0 = inlined_call_operand.vmem [shape: f32[8,128], index: 0, kind: input, shape index: {}]
  %s1 = inlined_call_operand.vmem [shape: f32[8,128], index: 1, kind: input, shape index: {}]
  %s2 = inlined_call_operand.vmem [shape: f32[2], index: 2, kind: output, shape index: {}]
  %s3 = sld [smem:[#allocation0]]
  $region26: #{discriminator_loss.1} parent=0
    _
  %s5 = ssub.s32 1, %s3
  %s6 = scalar_select 0, %s5, %s3
  $region1: #{discriminator_loss.1} parent=0
    #allocation4 [shape = 'u8[512]{0}', space=smem, size = 0x200, scoped, tag = 'output window, operand 0, single buffered']
    #allocation5 [shape = 's32[1]{0}', space=sflag, size = 0x4, scoped, tag = 'scoped memory for discriminator_loss.1']
    %7 = vsyncpa [#allocation5], 0
    // Predicated region
    $region2: #{discriminator_loss.1} parent=1 // pred_check
      _
    $region3: #{discriminator_loss.1} parent=1 // pred_check_branch
      %9 = sbr.rel (0) target = $region5
    $region4: #{discriminator_loss.1} parent=1 // pred_region
      _
    $region5: #{discriminator_loss.1} parent=1 // pred_fallthru
      _
    // Predicated region
    $region6: #{discriminator_loss.1} parent=1 // pred_check
      _
    $region7: #{discriminator_loss.1} parent=1 // pred_check_branch
      %11 = sbr.rel (0) target = $region9
    $region8: #{discriminator_loss.1} parent=1 // pred_region
      _
    $region9: #{discriminator_loss.1} parent=1 // pred_fallthru
      _
    %p12 = scmp.eq.s32.totalorder 0, 0
    // Predicated region
    $region10: #{discriminator_loss.1} parent=1 // pred_check
      %p13 = pneg %p12
    $region11: #{discriminator_loss.1} parent=1 // pred_check_branch
      %15 = sbr.rel (%p13) target = $region13
    $region12: #{discriminator_loss.1} parent=1 // pred_region
      %16 = vst [vmem:[#allocation2] sm:$0xff] 0.0
      %17 = vst [vmem:[#allocation3] sm:$0xff] 0.0
    $region13: #{discriminator_loss.1} parent=1 // pred_fallthru
      _
    %v18 = vld [vmem:[%s0] sm:$0xff]
    %v19 = vld [vmem:[%s1] sm:$0xff]
    %v20 = vlog2.pop %v18
    %v21 = vmul.f32 %v20, 0.6931472
    %v22 = vsub.f32 0.0, %v21
    %v23 = vmin.f32 %v22, 100.0
    %v24 = vsub.f32 1.0, %v19
    %v25 = vlog2.pop %v24
    %v26 = vmul.f32 %v25, 0.6931472
    %v27 = vsub.f32 0.0, %v26
    %v28 = vmin.f32 %v27, 100.0
    %v29 = vld [vmem:[#allocation2] sm:$0xff]
    %v30 = vadd.f32 %v23, 0.0
    %v31 = vadd.f32 %v29, %v30
    %32 = vst [vmem:[#allocation2] sm:$0xff] %v31
    %v33 = vld [vmem:[#allocation3] sm:$0xff]
    %v34 = vadd.f32 %v28, 0.0
    %v35 = vadd.f32 %v33, %v34
    %36 = vst [vmem:[#allocation3] sm:$0xff] %v35
    // Predicated region
    $region14: #{discriminator_loss.1} parent=1 // pred_check
      %p37 = pneg %p12
    $region15: #{discriminator_loss.1} parent=1 // pred_check_branch
      %39 = sbr.rel (%p37) target = $region17
    $region16: #{discriminator_loss.1} parent=1 // pred_region
      %v40 = vld [vmem:[#allocation2] sm:$0xff]
      %41 = vadd.xlane.f32.xlu0 %v40
      %v42 = vpop.xlane.xlu0 %41
      %v43 = vrot.slane %v42, 4
      %v44 = vadd.f32 %v42, %v43
      %v45 = vrot.slane %v44, 2
      %v46 = vadd.f32 %v44, %v45
      %v47 = vrot.slane %v46, 1
      %v48 = vadd.f32 %v46, %v47
      %s49 = vtos %v48
      %s50 = scalar_lea.smem [#allocation4], 0
      %51 = sst [smem:[%s50]] %s49
      %v52 = vld [vmem:[#allocation3] sm:$0xff]
      %53 = vadd.xlane.f32.xlu0 %v52
      %v54 = vpop.xlane.xlu0 %53
      %v55 = vrot.slane %v54, 4
      %v56 = vadd.f32 %v54, %v55
      %v57 = vrot.slane %v56, 2
      %v58 = vadd.f32 %v56, %v57
      %v59 = vrot.slane %v58, 1
      %v60 = vadd.f32 %v58, %v59
      %s61 = vtos %v60
      %s62 = scalar_lea.smem [#allocation4], 1
      %63 = sst [smem:[%s62]] %s61
    $region17: #{discriminator_loss.1} parent=1 // pred_fallthru
      _
    // Predicated region
    $region18: #{discriminator_loss.1} parent=1 // pred_check
      _
    $region19: #{discriminator_loss.1} parent=1 // pred_check_branch
      %65 = sbr.rel (0) target = $region21
    $region20: #{discriminator_loss.1} parent=1 // pred_region
      %67 = vsyncadd [#allocation5], 0
      %s69 = sshll.u32 %s2, 4
      %s70 = int_to_ptr.vmem [resolvable:$true] %s69
      %72 = dma.smem_to_vmem [#allocation4], 16, %s70, [#allocation5]
    $region21: #{discriminator_loss.1} parent=1 // pred_fallthru
      _
    // Predicated region
    $region22: #{discriminator_loss.1} parent=1 // pred_check
      _
    $region23: #{discriminator_loss.1} parent=1 // pred_check_branch
      %74 = sbr.rel (0) target = $region25
    $region24: #{discriminator_loss.1} parent=1 // pred_region
      %76 = dma.done [#allocation5], 16
    $region25: #{discriminator_loss.1} parent=1 // pred_fallthru
      _
    %77 = sfence
    %78 = vsyncpa [#allocation5], 1

</llo_original>
